<compile_context>
chip_gen: v7x
topology: tpu7x:2x2x1
jax: 0.10.0
libtpu: 0.0.40
codegen_flags: <defaults>
</compile_context>

<pallas_src>
import functools

import jax
import jax.numpy as jnp
from jax.experimental import pallas as pl
from jax.experimental.pallas import tpu as pltpu

K = 3          # conv kernel size
COUT = 5       # all convs have 5 output channels
CIN_PAD = 8    # fused input channels (1 + 3, padded to a sublane tile)
CMID_PAD = 16  # fused intermediate channels (5 + 5, padded to 2 sublane tiles)


def _mimo_kernel(x_ref, p_ref, out_ref, *, width):
    """x_ref: (8, nb*H*W) lane-flat fused input; p_ref: (24,256) param slab.

    Geometry: flat position p = n*H*W + h*W + w.  A 3x3 tap (ky,kx) at p is the
    value at p + ky*W + kx, so each tap is a lane-offset slice of the same flat
    tensor; positions whose (h, w) is within 2 (stage 1) / 4 (stage 2) of the
    image edge hold garbage and are sliced away by the wrapper.
    """
    Wd = width
    P = x_ref.shape[1]
    Q1 = P - 2 * Wd - 2              # stage-1 column length
    Q2 = Q1 - 2 * Wd - 2             # stage-2 column length (== out lane dim)

    x = x_ref[...]                   # (8, P)   f32
    params = p_ref[...]              # (24, 256) f32
    w1 = params[0:CMID_PAD, 0:K * K * CIN_PAD]          # (16, 72)
    b1 = params[0:CMID_PAD, 72:73]                      # (16, 1)
    w2 = params[CMID_PAD:CMID_PAD + COUT, 0:K * K * CMID_PAD]   # (5, 144)
    b2 = params[CMID_PAD:CMID_PAD + COUT, 144:145]              # (5, 1)

    # ---- stage 1: fused Conv2d(1,5,3) ⊕ Conv2d(3,5,3), one im2col + one dot --
    cols1 = jnp.concatenate(
        [x[:, ky * Wd + kx: ky * Wd + kx + Q1]
         for ky in range(K) for kx in range(K)],
        axis=0)                                          # (72, Q1), 8-aligned taps
    h = jnp.dot(w1, cols1, preferred_element_type=jnp.float32) + b1
    h = jnp.maximum(h, 0.0)                              # (16, Q1); rows 10..15 = 0

    # ---- stage 2: fused Conv2d(5,5,3) + Conv2d(5,5,3), one im2col + one dot --
    cols2 = jnp.concatenate(
        [h[:, ky * Wd + kx: ky * Wd + kx + Q2]
         for ky in range(K) for kx in range(K)],
        axis=0)                                          # (144, Q2), 16-aligned taps
    out = jnp.dot(w2, cols2, preferred_element_type=jnp.float32) + b2  # (5, Q2)

    out_ref[...] = out[None].astype(out_ref.dtype)       # (1, 5, Q2), lane-dense


def _pack_params(p):
    """Pack all weights/biases into a single (24, 256) f32 slab.

    rows 0:16 , cols 0:72   -> block-diagonal stage-1 weight (tap-major,
                               per-tap channel order [x1c0, x2c0, x2c1, x2c2, 0*4])
    rows 0:16 , col  72     -> stage-1 bias [b1a; b2a; 0*6]
    rows 16:21, cols 0:144  -> fused stage-2 weight (per-tap channels
                               [h1c0..h1c4, h2c0..h2c4, 0*6])
    rows 16:21, col  144    -> summed stage-2 bias (b1b + b2b)
    """
    w1 = jnp.zeros((CMID_PAD, K * K, CIN_PAD), jnp.float32)
    w1 = w1.at[0:COUT, :, 0].set(p["w1a"][:, 0].reshape(COUT, K * K))
    w1 = w1.at[COUT:2 * COUT, :, 1:4].set(
        jnp.transpose(p["w2a"], (0, 2, 3, 1)).reshape(COUT, K * K, 3))
    w1 = w1.reshape(CMID_PAD, K * K * CIN_PAD)           # (16, 72)

    w2 = jnp.zeros((COUT, K * K, CMID_PAD), jnp.float32)
    w2 = w2.at[:, :, 0:COUT].set(
        jnp.transpose(p["w1b"], (0, 2, 3, 1)).reshape(COUT, K * K, COUT))
    w2 = w2.at[:, :, COUT:2 * COUT].set(
        jnp.transpose(p["w2b"], (0, 2, 3, 1)).reshape(COUT, K * K, COUT))
    w2 = w2.reshape(COUT, K * K * CMID_PAD)              # (5, 144)

    b1 = jnp.zeros((CMID_PAD,), jnp.float32)
    b1 = b1.at[0:COUT].set(p["b1a"]).at[COUT:2 * COUT].set(p["b2a"])
    b2 = p["b1b"] + p["b2b"]                             # summed once

    slab = jnp.zeros((24, 256), jnp.float32)
    slab = slab.at[0:CMID_PAD, 0:K * K * CIN_PAD].set(w1)
    slab = slab.at[0:CMID_PAD, 72].set(b1)
    slab = slab.at[CMID_PAD:CMID_PAD + COUT, 0:K * K * CMID_PAD].set(w2)
    slab = slab.at[CMID_PAD:CMID_PAD + COUT, 144].set(b2)
    return slab


def _num_batch_blocks(N, HW):
    """G=1 on single-TC chips (v5e/v6e); split into 2 parallel steps on 2-TC v7x."""
    try:
        kind = jax.devices()[0].device_kind.lower()
        if "v7" in kind and N % 2 == 0 and ((N // 2) * HW) % 128 == 0:
            return 2
    except Exception:
        pass
    return 1


def multiin_multiout_forward(x1_nchw, x2_nchw, p):
    """x1_nchw: (N,1,H,W), x2_nchw: (N,3,H,W) -> (N,5,H-4,W-4), float32."""
    N, _, H, W = x1_nchw.shape
    Ho, Wo = H - 2 * (K - 1), W - 2 * (K - 1)
    HW = H * W

    G = _num_batch_blocks(N, HW)
    nb = N // G

    # Fused, channel-padded (4->8), channels-first, lane-flattened input slab.
    xc = jnp.concatenate(
        [x1_nchw.astype(jnp.float32), x2_nchw.astype(jnp.float32),
         jnp.zeros((N, CIN_PAD - 4, H, W), jnp.float32)], axis=1)      # (N,8,H,W)
    x_flat = jnp.transpose(xc, (1, 0, 2, 3)).reshape(CIN_PAD, N * HW)  # (8, N*H*W)

    slab = _pack_params(p)                                             # (24, 256)

    Q2b = nb * HW - 4 * W - 4        # per-block flat output length (lane-dense)

    out_flat = pl.pallas_call(
        functools.partial(_mimo_kernel, width=W),
        out_shape=jax.ShapeDtypeStruct((G, COUT, Q2b), jnp.float32),
        grid_spec=pltpu.PrefetchScalarGridSpec(
            num_scalar_prefetch=0,
            grid=(G,),
            in_specs=[
                pl.BlockSpec((CIN_PAD, nb * HW), lambda g: (0, g)),    # input
                pl.BlockSpec(slab.shape, lambda g: (0, 0)),            # param slab
            ],
            out_specs=pl.BlockSpec((1, COUT, Q2b), lambda g: (g, 0, 0)),
        ),
        compiler_params=pltpu.CompilerParams(
            dimension_semantics=(("parallel",) if G > 1 else ("arbitrary",))),
    )(x_flat, slab)

    # Flat stride-W geometry -> NCHW; pure wrapper-side layout plumbing.
    out = jnp.pad(out_flat, ((0, 0), (0, 0), (0, 4 * W + 4)))   # (G,5,nb*H*W)
    out = out.reshape(G, COUT, nb, H, W)[:, :, :, :Ho, :Wo]
    out = jnp.transpose(out, (0, 2, 1, 3, 4)).reshape(N, COUT, Ho, Wo)
    return out


def init_params(key):
    """Deterministic synthetic params, PyTorch layouts: w (Cout,Cin,3,3), b (Cout,)."""
    ks = jax.random.split(key, 8)
    def w(k, cin):
        return 0.1 * jax.random.normal(k, (COUT, cin, K, K), jnp.float32)
    def b(k):
        return 0.1 * jax.random.normal(k, (COUT,), jnp.float32)
    return {
        "w1a": w(ks[0], 1), "b1a": b(ks[1]),
        "w1b": w(ks[2], COUT), "b1b": b(ks[3]),
        "w2a": w(ks[4], 3), "b2a": b(ks[5]),
        "w2b": w(ks[6], COUT), "b2b": b(ks[7]),
    }


def _ref_forward(x1, x2, p):
    """Pure-JAX reference (lax.conv, NCHW) for correctness checking."""
    def conv(x, w, b):
        y = jax.lax.conv_general_dilated(
            x, w, window_strides=(1, 1), padding="VALID",
            dimension_numbers=("NCHW", "OIHW", "NCHW"))
        return y + b.reshape(1, -1, 1, 1)
    h1 = jax.nn.relu(conv(x1, p["w1a"], p["b1a"]))
    o1 = conv(h1, p["w1b"], p["b1b"])
    h2 = jax.nn.relu(conv(x2, p["w2a"], p["b2a"]))
    o2 = conv(h2, p["w2b"], p["b2b"])
    return o1 + o2


if __name__ == "__main__":
    key = jax.random.PRNGKey(0)
    kx1, kx2, kp = jax.random.split(key, 3)

    N, H, W = 2, 16, 16
    x1 = jax.random.normal(kx1, (N, 1, H, W), jnp.float32)   # PyTorch NCHW
    x2 = jax.random.normal(kx2, (N, 3, H, W), jnp.float32)
    params = init_params(kp)

    out = multiin_multiout_forward(x1, x2, params)
    out = jax.block_until_ready(out)

    ref = jax.block_until_ready(_ref_forward(x1, x2, params))
    assert out.shape == (N, 5, H - 4, W - 4), out.shape
    assert jnp.allclose(out, ref, atol=1e-4, rtol=1e-4), \
        float(jnp.max(jnp.abs(out - ref)))

    print("KERNEL_OK")
</pallas_src>

<mosaic_0001>
module attributes {stable_mosaic.version = 11 : i64} {
  func.func @_mimo_kernel(%arg0: i32, %arg1: memref<8x512xf32, #tpu.memory_space<vmem>>, %arg2: memref<24x256xf32, #tpu.memory_space<vmem>>, %arg3: memref<1x5x444xf32, #tpu.memory_space<vmem>>) attributes {dimension_semantics = [#tpu.dimension_semantics<arbitrary>], iteration_bounds = array<i64: 1>, scalar_prefetch = 0 : i64, scratch_operands = 0 : i64, tpu.core_type = #tpu.core_type<tc>, window_params = [{transform_indices = @transform_0, window_bounds = array<i64: 8, 512>}, {pipeline_mode = #tpu.pipeline_mode<synchronous>, transform_indices = @transform_1, window_bounds = array<i64: 24, 256>}, {transform_indices = @transform_2, window_bounds = array<i64: 1, 5, 444>}]} {
    %c0 = arith.constant 0 : index
    %c0_0 = arith.constant 0 : index
    %0 = vector.load %arg1[%c0, %c0_0] : memref<8x512xf32, #tpu.memory_space<vmem>>, vector<8x512xf32>
    %c0_1 = arith.constant 0 : index
    %c0_2 = arith.constant 0 : index
    %1 = vector.load %arg2[%c0_1, %c0_2] : memref<24x256xf32, #tpu.memory_space<vmem>>, vector<24x256xf32>
    %2 = vector.extract_strided_slice %1 {offsets = [0, 0], sizes = [16, 72], strides = [1, 1]} : vector<24x256xf32> to vector<16x72xf32>
    %3 = vector.extract_strided_slice %1 {offsets = [0, 72], sizes = [16, 1], strides = [1, 1]} : vector<24x256xf32> to vector<16x1xf32>
    %4 = vector.extract_strided_slice %1 {offsets = [16, 0], sizes = [5, 144], strides = [1, 1]} : vector<24x256xf32> to vector<5x144xf32>
    %5 = vector.extract_strided_slice %1 {offsets = [16, 144], sizes = [5, 1], strides = [1, 1]} : vector<24x256xf32> to vector<5x1xf32>
    %6 = vector.extract_strided_slice %0 {offsets = [0, 0], sizes = [8, 478], strides = [1, 1]} : vector<8x512xf32> to vector<8x478xf32>
    %7 = vector.extract_strided_slice %0 {offsets = [0, 1], sizes = [8, 478], strides = [1, 1]} : vector<8x512xf32> to vector<8x478xf32>
    %8 = vector.extract_strided_slice %0 {offsets = [0, 2], sizes = [8, 478], strides = [1, 1]} : vector<8x512xf32> to vector<8x478xf32>
    %9 = vector.extract_strided_slice %0 {offsets = [0, 16], sizes = [8, 478], strides = [1, 1]} : vector<8x512xf32> to vector<8x478xf32>
    %10 = vector.extract_strided_slice %0 {offsets = [0, 17], sizes = [8, 478], strides = [1, 1]} : vector<8x512xf32> to vector<8x478xf32>
    %11 = vector.extract_strided_slice %0 {offsets = [0, 18], sizes = [8, 478], strides = [1, 1]} : vector<8x512xf32> to vector<8x478xf32>
    %12 = vector.extract_strided_slice %0 {offsets = [0, 32], sizes = [8, 478], strides = [1, 1]} : vector<8x512xf32> to vector<8x478xf32>
    %13 = vector.extract_strided_slice %0 {offsets = [0, 33], sizes = [8, 478], strides = [1, 1]} : vector<8x512xf32> to vector<8x478xf32>
    %14 = vector.extract_strided_slice %0 {offsets = [0, 34], sizes = [8, 478], strides = [1, 1]} : vector<8x512xf32> to vector<8x478xf32>
    %15 = tpu.concatenate %6, %7, %8, %9, %10, %11, %12, %13, %14 in 0 : vector<8x478xf32>, vector<8x478xf32>, vector<8x478xf32>, vector<8x478xf32>, vector<8x478xf32>, vector<8x478xf32>, vector<8x478xf32>, vector<8x478xf32>, vector<8x478xf32> -> vector<72x478xf32>
    %cst = arith.constant dense<0.000000e+00> : vector<16x478xf32>
    %16 = tpu.matmul %2, %15, %cst {dimension_numbers = #tpu.dot_dimension_numbers<[1], [0], [0], [1], [0, 0, 1, 1], [], []>} : vector<16x72xf32>, vector<72x478xf32>, vector<16x478xf32> -> vector<16x478xf32>
    %17 = vector.broadcast %3 : vector<16x1xf32> to vector<16x478xf32>
    %18 = arith.addf %16, %17 : vector<16x478xf32>
    %cst_3 = arith.constant 0.000000e+00 : f32
    %19 = vector.broadcast %cst_3 : f32 to vector<16x478xf32>
    %20 = arith.maximumf %18, %19 : vector<16x478xf32>
    %21 = vector.extract_strided_slice %20 {offsets = [0, 0], sizes = [16, 444], strides = [1, 1]} : vector<16x478xf32> to vector<16x444xf32>
    %22 = vector.extract_strided_slice %20 {offsets = [0, 1], sizes = [16, 444], strides = [1, 1]} : vector<16x478xf32> to vector<16x444xf32>
    %23 = vector.extract_strided_slice %20 {offsets = [0, 2], sizes = [16, 444], strides = [1, 1]} : vector<16x478xf32> to vector<16x444xf32>
    %24 = vector.extract_strided_slice %20 {offsets = [0, 16], sizes = [16, 444], strides = [1, 1]} : vector<16x478xf32> to vector<16x444xf32>
    %25 = vector.extract_strided_slice %20 {offsets = [0, 17], sizes = [16, 444], strides = [1, 1]} : vector<16x478xf32> to vector<16x444xf32>
    %26 = vector.extract_strided_slice %20 {offsets = [0, 18], sizes = [16, 444], strides = [1, 1]} : vector<16x478xf32> to vector<16x444xf32>
    %27 = vector.extract_strided_slice %20 {offsets = [0, 32], sizes = [16, 444], strides = [1, 1]} : vector<16x478xf32> to vector<16x444xf32>
    %28 = vector.extract_strided_slice %20 {offsets = [0, 33], sizes = [16, 444], strides = [1, 1]} : vector<16x478xf32> to vector<16x444xf32>
    %29 = vector.extract_strided_slice %20 {offsets = [0, 34], sizes = [16, 444], strides = [1, 1]} : vector<16x478xf32> to vector<16x444xf32>
    %30 = tpu.concatenate %21, %22, %23, %24, %25, %26, %27, %28, %29 in 0 : vector<16x444xf32>, vector<16x444xf32>, vector<16x444xf32>, vector<16x444xf32>, vector<16x444xf32>, vector<16x444xf32>, vector<16x444xf32>, vector<16x444xf32>, vector<16x444xf32> -> vector<144x444xf32>
    %cst_4 = arith.constant dense<0.000000e+00> : vector<5x444xf32>
    %31 = tpu.matmul %4, %30, %cst_4 {dimension_numbers = #tpu.dot_dimension_numbers<[1], [0], [0], [1], [0, 0, 1, 1], [], []>} : vector<5x144xf32>, vector<144x444xf32>, vector<5x444xf32> -> vector<5x444xf32>
    %32 = vector.broadcast %5 : vector<5x1xf32> to vector<5x444xf32>
    %33 = arith.addf %31, %32 : vector<5x444xf32>
    %34 = vector.shape_cast %33 : vector<5x444xf32> to vector<1x5x444xf32>
    %c0_5 = arith.constant 0 : index
    %c0_6 = arith.constant 0 : index
    %c0_7 = arith.constant 0 : index
    %35 = vector.load %arg3[%c0_5, %c0_6, %c0_7] : memref<1x5x444xf32, #tpu.memory_space<vmem>>, vector<1x5x444xf32>
    tpu.vector_store %arg3[%c0_5, %c0_6, %c0_7], %34 {strides = array<i32>} : memref<1x5x444xf32, #tpu.memory_space<vmem>>, vector<1x5x444xf32>,
    return
  }
  func.func @transform_0(%arg0: i32) -> (i32, i32) {
    %c0_i32 = arith.constant 0 : i32
    %c0_i32_0 = arith.constant 0 : i32
    return %c0_i32, %arg0 : i32, i32
  }
  func.func @transform_1(%arg0: i32) -> (i32, i32) {
    %c0_i32 = arith.constant 0 : i32
    %c0_i32_0 = arith.constant 0 : i32
    %c0_i32_1 = arith.constant 0 : i32
    return %c0_i32, %c0_i32_0 : i32, i32
  }
  func.func @transform_2(%arg0: i32) -> (i32, i32, i32) {
    %c0_i32 = arith.constant 0 : i32
    %c0_i32_0 = arith.constant 0 : i32
    %c0_i32_1 = arith.constant 0 : i32
    return %arg0, %c0_i32, %c0_i32_0 : i32, i32, i32
  }
}

</mosaic_0001>

<llo_original>
// kernel: tpu_custom_call.1
$region0: #{tpu_custom_call.1}
  #allocation0 [shape = 'u32[]', space=smem, size = 0x4, offset = 0x4, fixed_abs, tag = 'smem constant byte address 0x4 - core index']
  #allocation1 [shape = 'u32[144,128]{1,0:T(1,128)}', space=vmem, size = 0x12000, scoped, tag = 'internal scratch']
  %s0 = inlined_call_operand.hbm [shape: f32[8,512], index: 0, kind: input, shape index: {}]
  %s1 = inlined_call_operand.hbm [shape: f32[24,256], index: 1, kind: input, shape index: {}]
  %s2 = inlined_call_operand.vmem [shape: f32[1,5,444], index: 2, kind: output, shape index: {}]
  %s3 = sld [smem:[#allocation0]]
  $region26: #{tpu_custom_call.1} parent=0
    _
  %s5 = ssub.s32 1, %s3
  %s6 = scalar_select 0, %s5, %s3
  $region1: #{tpu_custom_call.1} parent=0
    #allocation2 [shape = 'u8[16384]{0}', space=vmem, size = 0x4000, scoped, tag = 'input window, operand 0, single buffered']
    #allocation3 [shape = 's32[1]{0}', space=sflag, size = 0x4, scoped, tag = 'scoped memory for tpu_custom_call.1']
    #allocation4 [shape = 'u8[24576]{0}', space=vmem, size = 0x6000, scoped, tag = 'input window, operand 1, single buffered']
    #allocation5 [shape = 's32[1]{0}', space=sflag, size = 0x4, scoped, tag = 'scoped memory for tpu_custom_call.1']
    %7 = vsyncpa [#allocation3], 0
    %8 = vsyncpa [#allocation5], 0
    // Predicated region
    $region2: #{tpu_custom_call.1} parent=1 // pred_check
      _
    $region3: #{tpu_custom_call.1} parent=1 // pred_check_branch
      %10 = sbr.rel (0) target = $region5
    $region4: #{tpu_custom_call.1} parent=1 // pred_region
      %s12 = ssub.s32 512, 512
      %13 = vsyncadd [#allocation3], %s12
      %s15 = sshll.u32 [#allocation2], 4
      %s16 = int_to_ptr.vmem [resolvable:$true] %s15
      %18 = dma.hbm_to_vmem [thread:$0]  %s0, 512, %s16, [#allocation3]
    $region5: #{tpu_custom_call.1} parent=1 // pred_fallthru
      _
    // Predicated region
    $region6: #{tpu_custom_call.1} parent=1 // pred_check
      _
    $region7: #{tpu_custom_call.1} parent=1 // pred_check_branch
      %20 = sbr.rel (0) target = $region9
    $region8: #{tpu_custom_call.1} parent=1 // pred_region
      %s22 = ssub.s32 768, 768
      %23 = vsyncadd [#allocation5], %s22
      %s24 = sshll.u32 [#allocation4], 4
      %s25 = int_to_ptr.vmem [resolvable:$true] %s24
      %30 = dma.hbm_to_vmem [thread:$0]  %s1, 768, %s25, [#allocation5], 256, 256, 16
    $region9: #{tpu_custom_call.1} parent=1 // pred_fallthru
      _
    // Predicated region
    $region10: #{tpu_custom_call.1} parent=1 // pred_check
      _
    $region11: #{tpu_custom_call.1} parent=1 // pred_check_branch
      %32 = sbr.rel (0) target = $region13
    $region12: #{tpu_custom_call.1} parent=1 // pred_region
      %33 = dma.done [#allocation3], 512
    $region13: #{tpu_custom_call.1} parent=1 // pred_fallthru
      _
    // Predicated region
    $region14: #{tpu_custom_call.1} parent=1 // pred_check
      _
    $region15: #{tpu_custom_call.1} parent=1 // pred_check_branch
      %35 = sbr.rel (0) target = $region17
    $region16: #{tpu_custom_call.1} parent=1 // pred_region
      %36 = dma.done [#allocation5], 768
    $region17: #{tpu_custom_call.1} parent=1 // pred_fallthru
      _
    %v37 = vld [vmem:[#allocation2] sm:$0xff]
    %v38 = vld [vmem:[#allocation2 + $0x8] sm:$0xff]
    %v39 = vld [vmem:[#allocation2 + $0x10] sm:$0xff]
    %v40 = vld [vmem:[#allocation2 + $0x18] sm:$0xff]
    %v41 = vld [vmem:[#allocation4] sm:$0xff]
    %v42 = vld [vmem:[#allocation4 + $0x10] sm:$0xff]
    %v43 = vld [vmem:[#allocation4 + $0x20] sm:$0xff]
    %v44 = vld [vmem:[#allocation4 + $0x28] sm:$0xff]
    %49 = vrot.lane.b32.xlu0 %v37, 127
    %v50 = vpop.permute.xlu0 %49
    %51 = vrot.lane.b32.xlu0 %v38, 127
    %v52 = vpop.permute.xlu0 %51
    %53 = vrot.lane.b32.xlu0 %v39, 127
    %v54 = vpop.permute.xlu0 %53
    %55 = vrot.lane.b32.xlu0 %v40, 127
    %v56 = vpop.permute.xlu0 %55
    %vm57 = vcmask 1039360
    %v58 = vsel %vm57, %v50, %v52
    %v59 = vsel %vm57, %v52, %v54
    %v60 = vsel %vm57, %v54, %v56
    %65 = vrot.lane.b32.xlu0 %v37, 126
    %v66 = vpop.permute.xlu0 %65
    %67 = vrot.lane.b32.xlu0 %v38, 126
    %v68 = vpop.permute.xlu0 %67
    %69 = vrot.lane.b32.xlu0 %v39, 126
    %v70 = vpop.permute.xlu0 %69
    %71 = vrot.lane.b32.xlu0 %v40, 126
    %v72 = vpop.permute.xlu0 %71
    %vm73 = vcmask 1031168
    %v74 = vsel %vm73, %v66, %v68
    %v75 = vsel %vm73, %v68, %v70
    %v76 = vsel %vm73, %v70, %v72
    %81 = vrot.lane.b32.xlu0 %v37, 112
    %v82 = vpop.permute.xlu0 %81
    %83 = vrot.lane.b32.xlu0 %v38, 112
    %v84 = vpop.permute.xlu0 %83
    %85 = vrot.lane.b32.xlu0 %v39, 112
    %v86 = vpop.permute.xlu0 %85
    %87 = vrot.lane.b32.xlu0 %v40, 112
    %v88 = vpop.permute.xlu0 %87
    %vm89 = vcmask 916480
    %v90 = vsel %vm89, %v82, %v84
    %v91 = vsel %vm89, %v84, %v86
    %v92 = vsel %vm89, %v86, %v88
    %97 = vrot.lane.b32.xlu0 %v37, 111
    %v98 = vpop.permute.xlu0 %97
    %99 = vrot.lane.b32.xlu0 %v38, 111
    %v100 = vpop.permute.xlu0 %99
    %101 = vrot.lane.b32.xlu0 %v39, 111
    %v102 = vpop.permute.xlu0 %101
    %103 = vrot.lane.b32.xlu0 %v40, 111
    %v104 = vpop.permute.xlu0 %103
    %vm105 = vcmask 908288
    %v106 = vsel %vm105, %v98, %v100
    %v107 = vsel %vm105, %v100, %v102
    %v108 = vsel %vm105, %v102, %v104
    %113 = vrot.lane.b32.xlu0 %v37, 110
    %v114 = vpop.permute.xlu0 %113
    %115 = vrot.lane.b32.xlu0 %v38, 110
    %v116 = vpop.permute.xlu0 %115
    %117 = vrot.lane.b32.xlu0 %v39, 110
    %v118 = vpop.permute.xlu0 %117
    %119 = vrot.lane.b32.xlu0 %v40, 110
    %v120 = vpop.permute.xlu0 %119
    %vm121 = vcmask 900096
    %v122 = vsel %vm121, %v114, %v116
    %v123 = vsel %vm121, %v116, %v118
    %v124 = vsel %vm121, %v118, %v120
    %129 = vrot.lane.b32.xlu0 %v37, 96
    %v130 = vpop.permute.xlu0 %129
    %131 = vrot.lane.b32.xlu0 %v38, 96
    %v132 = vpop.permute.xlu0 %131
    %133 = vrot.lane.b32.xlu0 %v39, 96
    %v134 = vpop.permute.xlu0 %133
    %135 = vrot.lane.b32.xlu0 %v40, 96
    %v136 = vpop.permute.xlu0 %135
    %vm137 = vcmask 785408
    %v138 = vsel %vm137, %v130, %v132
    %v139 = vsel %vm137, %v132, %v134
    %v140 = vsel %vm137, %v134, %v136
    %145 = vrot.lane.b32.xlu0 %v37, 95
    %v146 = vpop.permute.xlu0 %145
    %147 = vrot.lane.b32.xlu0 %v38, 95
    %v148 = vpop.permute.xlu0 %147
    %149 = vrot.lane.b32.xlu0 %v39, 95
    %v150 = vpop.permute.xlu0 %149
    %151 = vrot.lane.b32.xlu0 %v40, 95
    %v152 = vpop.permute.xlu0 %151
    %vm153 = vcmask 777216
    %v154 = vsel %vm153, %v146, %v148
    %v155 = vsel %vm153, %v148, %v150
    %v156 = vsel %vm153, %v150, %v152
    %161 = vrot.lane.b32.xlu0 %v37, 94
    %v162 = vpop.permute.xlu0 %161
    %163 = vrot.lane.b32.xlu0 %v38, 94
    %v164 = vpop.permute.xlu0 %163
    %165 = vrot.lane.b32.xlu0 %v39, 94
    %v166 = vpop.permute.xlu0 %165
    %167 = vrot.lane.b32.xlu0 %v40, 94
    %v168 = vpop.permute.xlu0 %167
    %vm169 = vcmask 769024
    %v170 = vsel %vm169, %v162, %v164
    %v171 = vsel %vm169, %v164, %v166
    %v172 = vsel %vm169, %v166, %v168
    %178 = vset.pattern.permute.xlu0 72
    %179 = vperm.xlu0 %178, %v41
    %v180 = vpop.permute.xlu0 %179
    %183 = vset.pattern.permute.xlu0 72
    %184 = vperm.xlu0 %183, %v42
    %v185 = vpop.permute.xlu0 %184
    %vm187 = vcmask 588800
    %v188 = vsel %vm187, %v41, 0
    %v190 = vsel %vm187, %v42, 0
    %192 = vmatprep.subr.mxu0 %v38
    %193 = vmatpush1.msra.mxu0 %v37
    %194 = vmatprep.subr.mxu0 %v59
    %195 = vmatpush1.msra.mxu0 %v58
    %196 = vmatprep.subr.mxu0 %v75
    %197 = vmatpush1.msra.mxu0 %v74
    %198 = vmatprep.subr.mxu0 %v91
    %199 = vmatpush1.msra.mxu0 %v90
    %200 = vmatprep.subr.mxu0 %v107
    %201 = vmatpush1.msra.mxu0 %v106
    %202 = vmatprep.subr.mxu0 %v123
    %203 = vmatpush1.msra.mxu0 %v122
    %204 = vmatprep.subr.mxu0 %v139
    %205 = vmatpush1.msra.mxu0 %v138
    %206 = vmatprep.subr.mxu0 %v155
    %207 = vmatpush1.msra.mxu0 %v154
    %208 = vmatprep.subr.mxu0 %v171
    %209 = vmatpush1.msra.mxu0 %v170
    %210 = vmatprep.subr.mxu0 0.0
    %211 = vmatpush1.msra.mxu0 0.0
    %212 = vmatprep.subr.mxu0 0.0
    %213 = vmatpush1.msra.mxu0 0.0
    %214 = vmatprep.subr.mxu0 0.0
    %215 = vmatpush1.msra.mxu0 0.0
    %216 = vmatprep.subr.mxu0 0.0
    %217 = vmatpush1.msra.mxu0 0.0
    %218 = vmatprep.subr.mxu0 0.0
    %219 = vmatpush1.msra.mxu0 0.0
    %220 = vmatprep.subr.mxu0 0.0
    %221 = vmatpush1.msra.mxu0 0.0
    %222 = vmatprep.subr.mxu0 0.0
    %223 = vmatpush1.msra.mxu0 0.0
    %224 = vmatprep.subr.mxu0 0.0
    %225 = vmatpush1.msra.mxu0 0.0
    %226 = vmatprep.subr.mxu0 0.0
    %227 = vmatpush1.msra.mxu0 0.0
    %228 = vmatprep.subr.mxu0 0.0
    %229 = vmatpush1.msra.mxu0 0.0
    %230 = vmatprep.subr.mxu0 0.0
    %231 = vmatpush1.msra.mxu0 0.0
    %232 = vmatprep.subr.mxu0 0.0
    %233 = vmatpush1.msra.mxu0 0.0
    %234 = vmatprep.subr.mxu0 0.0
    %235 = vmatpush1.msra.mxu0 0.0
    %236 = vmatprep.subr.mxu0 0.0
    %237 = vmatpush1.msra.mxu0 0.0
    %238 = vmatprep.subr.mxu0 0.0
    %239 = vmatpush1.msra.mxu0 0.0
    %240 = vmatprep.subr.mxu0 0.0
    %241 = vmatpush1.msra.mxu0 0.0
    %242 = vmatprep.subr.mxu0 0.0
    %243 = vmatpush1.msra.mxu0 0.0
    %244 = vmatprep.subr.mxu0 0.0
    %245 = vmatpush1.msra.mxu0 0.0
    %246 = vmatprep.subr.mxu0 0.0
    %247 = vmatpush1.msra.mxu0 0.0
    %248 = vmatprep.subr.mxu0 0.0
    %249 = vmatpush1.msra.mxu0 0.0
    %250 = vmatprep.subr.mxu0 0.0
    %251 = vmatpush1.msra.mxu0 0.0
    %252 = vmatprep.subr.mxu0 0.0
    %253 = vmatpush1.msra.mxu0 0.0
    %254 = vmatprep.subr.mxu0 0.0
    %255 = vmatpush1.msra.mxu0 0.0
    %256 = vmatprep.mubr.f32.mxu0 0.0
    %257 = vmatmul.mubr.f32.gmra.mrb[0].mxu0 %v188
    %v258 = vpop.f32.mrb[0].mxu0
    %v259 = vadd.f32 %v180, %v258
    %v260 = vpop.f32.mrb[0].mxu0
    %v261 = vadd.f32 %v180, %v260
    %262 = vmatprep.mubr.f32.mxu0 0.0
    %263 = vmatmul.mubr.f32.gmra.mrb[0].mxu0 %v190
    %v264 = vpop.f32.mrb[0].mxu0
    %v265 = vadd.f32 %v185, %v264
    %v266 = vpop.f32.mrb[0].mxu0
    %v267 = vadd.f32 %v185, %v266
    %268 = vdwg.mxu0
    %269 = vmatprep.subr.mxu0 %v40
    %270 = vmatpush1.msra.mxu0 %v39
    %271 = vmatprep.subr.mxu0 %v56
    %272 = vmatpush1.msra.mxu0 %v60
    %273 = vmatprep.subr.mxu0 %v72
    %274 = vmatpush1.msra.mxu0 %v76
    %275 = vmatprep.subr.mxu0 %v88
    %276 = vmatpush1.msra.mxu0 %v92
    %277 = vmatprep.subr.mxu0 %v104
    %278 = vmatpush1.msra.mxu0 %v108
    %279 = vmatprep.subr.mxu0 %v120
    %280 = vmatpush1.msra.mxu0 %v124
    %281 = vmatprep.subr.mxu0 %v136
    %282 = vmatpush1.msra.mxu0 %v140
    %283 = vmatprep.subr.mxu0 %v152
    %284 = vmatpush1.msra.mxu0 %v156
    %285 = vmatprep.subr.mxu0 %v168
    %286 = vmatpush1.msra.mxu0 %v172
    %287 = vmatprep.subr.mxu0 0.0
    %288 = vmatpush1.msra.mxu0 0.0
    %289 = vmatprep.subr.mxu0 0.0
    %290 = vmatpush1.msra.mxu0 0.0
    %291 = vmatprep.subr.mxu0 0.0
    %292 = vmatpush1.msra.mxu0 0.0
    %293 = vmatprep.subr.mxu0 0.0
    %294 = vmatpush1.msra.mxu0 0.0
    %295 = vmatprep.subr.mxu0 0.0
    %296 = vmatpush1.msra.mxu0 0.0
    %297 = vmatprep.subr.mxu0 0.0
    %298 = vmatpush1.msra.mxu0 0.0
    %299 = vmatprep.subr.mxu0 0.0
    %300 = vmatpush1.msra.mxu0 0.0
    %301 = vmatprep.subr.mxu0 0.0
    %302 = vmatpush1.msra.mxu0 0.0
    %303 = vmatprep.subr.mxu0 0.0
    %304 = vmatpush1.msra.mxu0 0.0
    %305 = vmatprep.subr.mxu0 0.0
    %306 = vmatpush1.msra.mxu0 0.0
    %307 = vmatprep.subr.mxu0 0.0
    %308 = vmatpush1.msra.mxu0 0.0
    %309 = vmatprep.subr.mxu0 0.0
    %310 = vmatpush1.msra.mxu0 0.0
    %311 = vmatprep.subr.mxu0 0.0
    %312 = vmatpush1.msra.mxu0 0.0
    %313 = vmatprep.subr.mxu0 0.0
    %314 = vmatpush1.msra.mxu0 0.0
    %315 = vmatprep.subr.mxu0 0.0
    %316 = vmatpush1.msra.mxu0 0.0
    %317 = vmatprep.subr.mxu0 0.0
    %318 = vmatpush1.msra.mxu0 0.0
    %319 = vmatprep.subr.mxu0 0.0
    %320 = vmatpush1.msra.mxu0 0.0
    %321 = vmatprep.subr.mxu0 0.0
    %322 = vmatpush1.msra.mxu0 0.0
    %323 = vmatprep.subr.mxu0 0.0
    %324 = vmatpush1.msra.mxu0 0.0
    %325 = vmatprep.subr.mxu0 0.0
    %326 = vmatpush1.msra.mxu0 0.0
    %327 = vmatprep.subr.mxu0 0.0
    %328 = vmatpush1.msra.mxu0 0.0
    %329 = vmatprep.subr.mxu0 0.0
    %330 = vmatpush1.msra.mxu0 0.0
    %331 = vmatprep.subr.mxu0 0.0
    %332 = vmatpush1.msra.mxu0 0.0
    %333 = vmatprep.mubr.f32.mxu0 0.0
    %334 = vmatmul.mubr.f32.gmra.mrb[0].mxu0 %v188
    %v335 = vpop.f32.mrb[0].mxu0
    %v336 = vadd.f32 %v180, %v335
    %v337 = vpop.f32.mrb[0].mxu0
    %v338 = vadd.f32 %v180, %v337
    %339 = vmatprep.mubr.f32.mxu0 0.0
    %340 = vmatmul.mubr.f32.gmra.mrb[0].mxu0 %v190
    %v341 = vpop.f32.mrb[0].mxu0
    %v342 = vadd.f32 %v185, %v341
    %v343 = vpop.f32.mrb[0].mxu0
    %v344 = vadd.f32 %v185, %v343
    %345 = vdwg.mxu0
    %v346 = vmax.f32 %v259, 0.0
    %v347 = vmax.f32 %v261, 0.0
    %v348 = vmax.f32 %v336, 0.0
    %v349 = vmax.f32 %v338, 0.0
    %v350 = vmax.f32 %v265, 0.0
    %v351 = vmax.f32 %v267, 0.0
    %v352 = vmax.f32 %v342, 0.0
    %v353 = vmax.f32 %v344, 0.0
    %362 = vrot.lane.b32.xlu0 %v346, 127
    %v363 = vpop.permute.xlu0 %362
    %364 = vrot.lane.b32.xlu0 %v347, 127
    %v365 = vpop.permute.xlu0 %364
    %366 = vrot.lane.b32.xlu0 %v348, 127
    %v367 = vpop.permute.xlu0 %366
    %368 = vrot.lane.b32.xlu0 %v349, 127
    %v369 = vpop.permute.xlu0 %368
    %370 = vrot.lane.b32.xlu0 %v350, 127
    %v371 = vpop.permute.xlu0 %370
    %372 = vrot.lane.b32.xlu0 %v351, 127
    %v373 = vpop.permute.xlu0 %372
    %374 = vrot.lane.b32.xlu0 %v352, 127
    %v375 = vpop.permute.xlu0 %374
    %376 = vrot.lane.b32.xlu0 %v353, 127
    %v377 = vpop.permute.xlu0 %376
    %v378 = vsel %vm57, %v363, %v365
    %v379 = vsel %vm57, %v365, %v367
    %v380 = vsel %vm57, %v367, %v369
    %v381 = vsel %vm57, %v371, %v373
    %v382 = vsel %vm57, %v373, %v375
    %v383 = vsel %vm57, %v375, %v377
    %392 = vrot.lane.b32.xlu0 %v346, 126
    %v393 = vpop.permute.xlu0 %392
    %394 = vrot.lane.b32.xlu0 %v347, 126
    %v395 = vpop.permute.xlu0 %394
    %396 = vrot.lane.b32.xlu0 %v348, 126
    %v397 = vpop.permute.xlu0 %396
    %398 = vrot.lane.b32.xlu0 %v349, 126
    %v399 = vpop.permute.xlu0 %398
    %400 = vrot.lane.b32.xlu0 %v350, 126
    %v401 = vpop.permute.xlu0 %400
    %402 = vrot.lane.b32.xlu0 %v351, 126
    %v403 = vpop.permute.xlu0 %402
    %404 = vrot.lane.b32.xlu0 %v352, 126
    %v405 = vpop.permute.xlu0 %404
    %406 = vrot.lane.b32.xlu0 %v353, 126
    %v407 = vpop.permute.xlu0 %406
    %v408 = vsel %vm73, %v393, %v395
    %v409 = vsel %vm73, %v395, %v397
    %v410 = vsel %vm73, %v397, %v399
    %v411 = vsel %vm73, %v401, %v403
    %v412 = vsel %vm73, %v403, %v405
    %v413 = vsel %vm73, %v405, %v407
    %422 = vrot.lane.b32.xlu0 %v346, 112
    %v423 = vpop.permute.xlu0 %422
    %424 = vrot.lane.b32.xlu0 %v347, 112
    %v425 = vpop.permute.xlu0 %424
    %426 = vrot.lane.b32.xlu0 %v348, 112
    %v427 = vpop.permute.xlu0 %426
    %428 = vrot.lane.b32.xlu0 %v349, 112
    %v429 = vpop.permute.xlu0 %428
    %430 = vrot.lane.b32.xlu0 %v350, 112
    %v431 = vpop.permute.xlu0 %430
    %432 = vrot.lane.b32.xlu0 %v351, 112
    %v433 = vpop.permute.xlu0 %432
    %434 = vrot.lane.b32.xlu0 %v352, 112
    %v435 = vpop.permute.xlu0 %434
    %436 = vrot.lane.b32.xlu0 %v353, 112
    %v437 = vpop.permute.xlu0 %436
    %v438 = vsel %vm89, %v423, %v425
    %v439 = vsel %vm89, %v425, %v427
    %v440 = vsel %vm89, %v427, %v429
    %v441 = vsel %vm89, %v431, %v433
    %v442 = vsel %vm89, %v433, %v435
    %v443 = vsel %vm89, %v435, %v437
    %452 = vrot.lane.b32.xlu0 %v346, 111
    %v453 = vpop.permute.xlu0 %452
    %454 = vrot.lane.b32.xlu0 %v347, 111
    %v455 = vpop.permute.xlu0 %454
    %456 = vrot.lane.b32.xlu0 %v348, 111
    %v457 = vpop.permute.xlu0 %456
    %458 = vrot.lane.b32.xlu0 %v349, 111
    %v459 = vpop.permute.xlu0 %458
    %460 = vrot.lane.b32.xlu0 %v350, 111
    %v461 = vpop.permute.xlu0 %460
    %462 = vrot.lane.b32.xlu0 %v351, 111
    %v463 = vpop.permute.xlu0 %462
    %464 = vrot.lane.b32.xlu0 %v352, 111
    %v465 = vpop.permute.xlu0 %464
    %466 = vrot.lane.b32.xlu0 %v353, 111
    %v467 = vpop.permute.xlu0 %466
    %v468 = vsel %vm105, %v453, %v455
    %v469 = vsel %vm105, %v455, %v457
    %v470 = vsel %vm105, %v457, %v459
    %v471 = vsel %vm105, %v461, %v463
    %v472 = vsel %vm105, %v463, %v465
    %v473 = vsel %vm105, %v465, %v467
    %482 = vrot.lane.b32.xlu0 %v346, 110
    %v483 = vpop.permute.xlu0 %482
    %484 = vrot.lane.b32.xlu0 %v347, 110
    %v485 = vpop.permute.xlu0 %484
    %486 = vrot.lane.b32.xlu0 %v348, 110
    %v487 = vpop.permute.xlu0 %486
    %488 = vrot.lane.b32.xlu0 %v349, 110
    %v489 = vpop.permute.xlu0 %488
    %490 = vrot.lane.b32.xlu0 %v350, 110
    %v491 = vpop.permute.xlu0 %490
    %492 = vrot.lane.b32.xlu0 %v351, 110
    %v493 = vpop.permute.xlu0 %492
    %494 = vrot.lane.b32.xlu0 %v352, 110
    %v495 = vpop.permute.xlu0 %494
    %496 = vrot.lane.b32.xlu0 %v353, 110
    %v497 = vpop.permute.xlu0 %496
    %v498 = vsel %vm121, %v483, %v485
    %v499 = vsel %vm121, %v485, %v487
    %v500 = vsel %vm121, %v487, %v489
    %v501 = vsel %vm121, %v491, %v493
    %v502 = vsel %vm121, %v493, %v495
    %v503 = vsel %vm121, %v495, %v497
    %512 = vrot.lane.b32.xlu0 %v346, 96
    %v513 = vpop.permute.xlu0 %512
    %514 = vrot.lane.b32.xlu0 %v347, 96
    %v515 = vpop.permute.xlu0 %514
    %516 = vrot.lane.b32.xlu0 %v348, 96
    %v517 = vpop.permute.xlu0 %516
    %518 = vrot.lane.b32.xlu0 %v349, 96
    %v519 = vpop.permute.xlu0 %518
    %520 = vrot.lane.b32.xlu0 %v350, 96
    %v521 = vpop.permute.xlu0 %520
    %522 = vrot.lane.b32.xlu0 %v351, 96
    %v523 = vpop.permute.xlu0 %522
    %524 = vrot.lane.b32.xlu0 %v352, 96
    %v525 = vpop.permute.xlu0 %524
    %526 = vrot.lane.b32.xlu0 %v353, 96
    %v527 = vpop.permute.xlu0 %526
    %v528 = vsel %vm137, %v513, %v515
    %v529 = vsel %vm137, %v515, %v517
    %v530 = vsel %vm137, %v517, %v519
    %v531 = vsel %vm137, %v521, %v523
    %v532 = vsel %vm137, %v523, %v525
    %v533 = vsel %vm137, %v525, %v527
    %542 = vrot.lane.b32.xlu0 %v346, 95
    %v543 = vpop.permute.xlu0 %542
    %544 = vrot.lane.b32.xlu0 %v347, 95
    %v545 = vpop.permute.xlu0 %544
    %546 = vrot.lane.b32.xlu0 %v348, 95
    %v547 = vpop.permute.xlu0 %546
    %548 = vrot.lane.b32.xlu0 %v349, 95
    %v549 = vpop.permute.xlu0 %548
    %550 = vrot.lane.b32.xlu0 %v350, 95
    %v551 = vpop.permute.xlu0 %550
    %552 = vrot.lane.b32.xlu0 %v351, 95
    %v553 = vpop.permute.xlu0 %552
    %554 = vrot.lane.b32.xlu0 %v352, 95
    %v555 = vpop.permute.xlu0 %554
    %556 = vrot.lane.b32.xlu0 %v353, 95
    %v557 = vpop.permute.xlu0 %556
    %v558 = vsel %vm153, %v543, %v545
    %v559 = vsel %vm153, %v545, %v547
    %v560 = vsel %vm153, %v547, %v549
    %v561 = vsel %vm153, %v551, %v553
    %v562 = vsel %vm153, %v553, %v555
    %v563 = vsel %vm153, %v555, %v557
    %572 = vrot.lane.b32.xlu0 %v346, 94
    %v573 = vpop.permute.xlu0 %572
    %574 = vrot.lane.b32.xlu0 %v347, 94
    %v575 = vpop.permute.xlu0 %574
    %576 = vrot.lane.b32.xlu0 %v348, 94
    %v577 = vpop.permute.xlu0 %576
    %578 = vrot.lane.b32.xlu0 %v349, 94
    %v579 = vpop.permute.xlu0 %578
    %580 = vrot.lane.b32.xlu0 %v350, 94
    %v581 = vpop.permute.xlu0 %580
    %582 = vrot.lane.b32.xlu0 %v351, 94
    %v583 = vpop.permute.xlu0 %582
    %584 = vrot.lane.b32.xlu0 %v352, 94
    %v585 = vpop.permute.xlu0 %584
    %586 = vrot.lane.b32.xlu0 %v353, 94
    %v587 = vpop.permute.xlu0 %586
    %v588 = vsel %vm169, %v573, %v575
    %v589 = vsel %vm169, %v575, %v577
    %v590 = vsel %vm169, %v577, %v579
    %v591 = vsel %vm169, %v581, %v583
    %v592 = vsel %vm169, %v583, %v585
    %v593 = vsel %vm169, %v585, %v587
    %603 = vset.pattern.permute.xlu0 16
    %604 = vperm.xlu0 %603, %v44
    %v605 = vpop.permute.xlu0 %604
    %vm607 = vcmask 130048
    %v608 = vsel %vm607, %v44, 0
    %610 = vmatprep.subr.mxu0 %v347
    %611 = vmatpush1.msra.mxu0 %v346
    %612 = vmatprep.subr.mxu0 %v351
    %613 = vmatpush1.msra.mxu0 %v350
    %614 = vmatprep.subr.mxu0 %v379
    %615 = vmatpush1.msra.mxu0 %v378
    %616 = vmatprep.subr.mxu0 %v382
    %617 = vmatpush1.msra.mxu0 %v381
    %618 = vmatprep.subr.mxu0 %v409
    %619 = vmatpush1.msra.mxu0 %v408
    %620 = vmatprep.subr.mxu0 %v412
    %621 = vmatpush1.msra.mxu0 %v411
    %622 = vmatprep.subr.mxu0 %v439
    %623 = vmatpush1.msra.mxu0 %v438
    %624 = vmatprep.subr.mxu0 %v442
    %625 = vmatpush1.msra.mxu0 %v441
    %626 = vmatprep.subr.mxu0 %v469
    %627 = vmatpush1.msra.mxu0 %v468
    %628 = vmatprep.subr.mxu0 %v472
    %629 = vmatpush1.msra.mxu0 %v471
    %630 = vmatprep.subr.mxu0 %v499
    %631 = vmatpush1.msra.mxu0 %v498
    %632 = vmatprep.subr.mxu0 %v502
    %633 = vmatpush1.msra.mxu0 %v501
    %634 = vmatprep.subr.mxu0 %v529
    %635 = vmatpush1.msra.mxu0 %v528
    %636 = vmatprep.subr.mxu0 %v532
    %637 = vmatpush1.msra.mxu0 %v531
    %638 = vmatprep.subr.mxu0 %v559
    %639 = vmatpush1.msra.mxu0 %v558
    %640 = vmatprep.subr.mxu0 %v562
    %641 = vmatpush1.msra.mxu0 %v561
    %642 = vmatprep.subr.mxu0 %v589
    %643 = vmatpush1.msra.mxu0 %v588
    %644 = vmatprep.subr.mxu0 %v592
    %645 = vmatpush1.msra.mxu0 %v591
    %646 = vmatprep.subr.mxu0 0.0
    %647 = vmatpush1.msra.mxu0 0.0
    %648 = vmatprep.subr.mxu0 0.0
    %649 = vmatpush1.msra.mxu0 0.0
    %650 = vmatprep.subr.mxu0 0.0
    %651 = vmatpush1.msra.mxu0 0.0
    %652 = vmatprep.subr.mxu0 0.0
    %653 = vmatpush1.msra.mxu0 0.0
    %654 = vmatprep.subr.mxu0 0.0
    %655 = vmatpush1.msra.mxu0 0.0
    %656 = vmatprep.subr.mxu0 0.0
    %657 = vmatpush1.msra.mxu0 0.0
    %658 = vmatprep.subr.mxu0 0.0
    %659 = vmatpush1.msra.mxu0 0.0
    %660 = vmatprep.subr.mxu0 0.0
    %661 = vmatpush1.msra.mxu0 0.0
    %662 = vmatprep.subr.mxu0 0.0
    %663 = vmatpush1.msra.mxu0 0.0
    %664 = vmatprep.subr.mxu0 0.0
    %665 = vmatpush1.msra.mxu0 0.0
    %666 = vmatprep.subr.mxu0 0.0
    %667 = vmatpush1.msra.mxu0 0.0
    %668 = vmatprep.subr.mxu0 0.0
    %669 = vmatpush1.msra.mxu0 0.0
    %670 = vmatprep.subr.mxu0 0.0
    %671 = vmatpush1.msra.mxu0 0.0
    %672 = vmatprep.subr.mxu0 0.0
    %673 = vmatpush1.msra.mxu0 0.0
    %674 = vmatprep.mubr.f32.mxu0 %v608
    %675 = vmatmul.mubr.f32.gmra.mrb[0].mxu0 %v43
    %v676 = vpop.f32.mrb[0].mxu0
    %v677 = vadd.f32 %v605, %v676
    %v678 = vpop.f32.mrb[0].mxu0
    %v679 = vadd.f32 %v605, %v678
    %680 = vdwg.mxu0
    %681 = vmatprep.subr.mxu0 %v349
    %682 = vmatpush1.msra.mxu0 %v348
    %683 = vmatprep.subr.mxu0 %v353
    %684 = vmatpush1.msra.mxu0 %v352
    %685 = vmatprep.subr.mxu0 %v369
    %686 = vmatpush1.msra.mxu0 %v380
    %687 = vmatprep.subr.mxu0 %v377
    %688 = vmatpush1.msra.mxu0 %v383
    %689 = vmatprep.subr.mxu0 %v399
    %690 = vmatpush1.msra.mxu0 %v410
    %691 = vmatprep.subr.mxu0 %v407
    %692 = vmatpush1.msra.mxu0 %v413
    %693 = vmatprep.subr.mxu0 %v429
    %694 = vmatpush1.msra.mxu0 %v440
    %695 = vmatprep.subr.mxu0 %v437
    %696 = vmatpush1.msra.mxu0 %v443
    %697 = vmatprep.subr.mxu0 %v459
    %698 = vmatpush1.msra.mxu0 %v470
    %699 = vmatprep.subr.mxu0 %v467
    %700 = vmatpush1.msra.mxu0 %v473
    %701 = vmatprep.subr.mxu0 %v489
    %702 = vmatpush1.msra.mxu0 %v500
    %703 = vmatprep.subr.mxu0 %v497
    %704 = vmatpush1.msra.mxu0 %v503
    %705 = vmatprep.subr.mxu0 %v519
    %706 = vmatpush1.msra.mxu0 %v530
    %707 = vmatprep.subr.mxu0 %v527
    %708 = vmatpush1.msra.mxu0 %v533
    %709 = vmatprep.subr.mxu0 %v549
    %710 = vmatpush1.msra.mxu0 %v560
    %711 = vmatprep.subr.mxu0 %v557
    %712 = vmatpush1.msra.mxu0 %v563
    %713 = vmatprep.subr.mxu0 %v579
    %714 = vmatpush1.msra.mxu0 %v590
    %715 = vmatprep.subr.mxu0 %v587
    %716 = vmatpush1.msra.mxu0 %v593
    %717 = vmatprep.subr.mxu0 0.0
    %718 = vmatpush1.msra.mxu0 0.0
    %719 = vmatprep.subr.mxu0 0.0
    %720 = vmatpush1.msra.mxu0 0.0
    %721 = vmatprep.subr.mxu0 0.0
    %722 = vmatpush1.msra.mxu0 0.0
    %723 = vmatprep.subr.mxu0 0.0
    %724 = vmatpush1.msra.mxu0 0.0
    %725 = vmatprep.subr.mxu0 0.0
    %726 = vmatpush1.msra.mxu0 0.0
    %727 = vmatprep.subr.mxu0 0.0
    %728 = vmatpush1.msra.mxu0 0.0
    %729 = vmatprep.subr.mxu0 0.0
    %730 = vmatpush1.msra.mxu0 0.0
    %731 = vmatprep.subr.mxu0 0.0
    %732 = vmatpush1.msra.mxu0 0.0
    %733 = vmatprep.subr.mxu0 0.0
    %734 = vmatpush1.msra.mxu0 0.0
    %735 = vmatprep.subr.mxu0 0.0
    %736 = vmatpush1.msra.mxu0 0.0
    %737 = vmatprep.subr.mxu0 0.0
    %738 = vmatpush1.msra.mxu0 0.0
    %739 = vmatprep.subr.mxu0 0.0
    %740 = vmatpush1.msra.mxu0 0.0
    %741 = vmatprep.subr.mxu0 0.0
    %742 = vmatpush1.msra.mxu0 0.0
    %743 = vmatprep.subr.mxu0 0.0
    %744 = vmatpush1.msra.mxu0 0.0
    %745 = vmatprep.mubr.f32.mxu0 %v608
    %746 = vmatmul.mubr.f32.gmra.mrb[0].mxu0 %v43
    %v747 = vpop.f32.mrb[0].mxu0
    %v748 = vadd.f32 %v605, %v747
    %v749 = vpop.f32.mrb[0].mxu0
    %v750 = vadd.f32 %v605, %v749
    %751 = vdwg.mxu0
    %752 = vst [vmem:[%s2] sm:$0x1f] %v677
    %753 = vst [vmem:[%s2 + $0x8] sm:$0x1f] %v679
    %754 = vst [vmem:[%s2 + $0x10] sm:$0x1f] %v748
    %vm755 = vcmask 487424
    %756 = vst.msk [vmem:[%s2 + $0x18] sm:$0x1f] %vm755, %v750
    // Predicated region
    $region18: #{tpu_custom_call.1} parent=1 // pred_check
      _
    $region19: #{tpu_custom_call.1} parent=1 // pred_check_branch
      %758 = sbr.rel (0) target = $region21
    $region20: #{tpu_custom_call.1} parent=1 // pred_region
      _
    $region21: #{tpu_custom_call.1} parent=1 // pred_fallthru
      _
    // Predicated region
    $region22: #{tpu_custom_call.1} parent=1 // pred_check
      _
    $region23: #{tpu_custom_call.1} parent=1 // pred_check_branch
      %760 = sbr.rel (0) target = $region25
    $region24: #{tpu_custom_call.1} parent=1 // pred_region
      _
    $region25: #{tpu_custom_call.1} parent=1 // pred_fallthru
      _
    %761 = vsyncpa [#allocation3], 1
    %762 = vsyncpa [#allocation5], 1

</llo_original>
